<compile_context>
chip_gen: v5e
topology: v5e:2x2
jax: 0.10.0
libtpu: 0.0.40
codegen_flags: <defaults>
</compile_context>

<pallas_src>
import jax
import jax.numpy as jnp
from jax.experimental import pallas as pl
from jax.experimental.pallas import tpu as pltpu

_VMEM = pl.BlockSpec(memory_space=pltpu.MemorySpace.VMEM)


# ---------------------------------------------------------------------------
# Fused kernel: entire ACPredGCN forward in one body, everything VMEM-resident.
# ---------------------------------------------------------------------------
def _make_fused_kernel(n_gcn, n_dnn_hidden):
    assert n_dnn_hidden >= 1  # ACNet configs always have >= 1 DNN hidden layer

    def kernel(*refs):
        it = iter(refs)
        a = next(it)[...]          # [N, N]  normalized adjacency (VMEM-resident)
        pe = next(it)[...]         # [P, N]  mean-pool rows, even molecule of each pair
        po = next(it)[...]         # [P, N]  mean-pool rows, odd  molecule of each pair
        h = next(it)[...]          # [N, in_dim] node features

        gcn = [(next(it), next(it)) for _ in range(n_gcn)]
        wt_ref, bt_ref = next(it), next(it)                       # transform to FPSize
        w0a_ref, w0b_ref, b0_ref = next(it), next(it), next(it)   # first DNN layer (split)
        rest = [(next(it), next(it)) for _ in range(n_dnn_hidden - 1)]
        wo_ref, bo_ref = next(it), next(it)                       # output linear
        out_ref = next(it)

        # --- GCN stack: relu( A_hat @ (h @ W) + b )  (exact PyG GCNConv + ReLU) ---
        for (w_ref, b_ref) in gcn:
            xw = jnp.dot(h, w_ref[...], preferred_element_type=jnp.float32)
            ah = jnp.dot(a, xw, preferred_element_type=jnp.float32)
            h = jnp.maximum(ah + b_ref[...], 0.0)

        # --- global mean pool + Linear to FPSize, fused as epilogue ---
        wt, bt = wt_ref[...], bt_ref[...]
        mol_e = jnp.dot(jnp.dot(pe, h, preferred_element_type=jnp.float32), wt,
                        preferred_element_type=jnp.float32) + bt      # [P, FP]
        mol_o = jnp.dot(jnp.dot(po, h, preferred_element_type=jnp.float32), wt,
                        preferred_element_type=jnp.float32) + bt      # [P, FP]

        # --- decompose_mol_pair + first DNN layer without any reshape/concat ---
        # [mol_e | mol_o] @ W0 == mol_e @ W0[:FP] + mol_o @ W0[FP:]
        z = jnp.maximum(
            jnp.dot(mol_e, w0a_ref[...], preferred_element_type=jnp.float32)
            + jnp.dot(mol_o, w0b_ref[...], preferred_element_type=jnp.float32)
            + b0_ref[...],
            0.0,
        )

        # --- remaining DNN hidden layers (Linear + ReLU) ---
        for (w_ref, b_ref) in rest:
            z = jnp.maximum(
                jnp.dot(z, w_ref[...], preferred_element_type=jnp.float32) + b_ref[...],
                0.0,
            )

        # --- Dropout (eval) == identity; final Linear -> only HBM write ---
        out_ref[...] = (
            jnp.dot(z, wo_ref[...], preferred_element_type=jnp.float32) + bo_ref[...]
        )

    return kernel


def ac_pred_gcn_forward(params, x, a_hat, pool_even, pool_odd):
    n_gcn = len(params["gcn"])
    dnn_hidden = params["dnn_hidden"]
    assert len(dnn_hidden) >= 1, "expect at least one DNN hidden layer (ACNet default)"
    fp = params["transform"][0].shape[1]

    # Split the first post-pair weight so the pair reshape never enters the kernel.
    w0, b0 = dnn_hidden[0]
    w0a, w0b = w0[:fp, :], w0[fp:, :]

    f32 = jnp.float32
    args = [a_hat.astype(f32), pool_even.astype(f32), pool_odd.astype(f32), x.astype(f32)]
    for (w, b) in params["gcn"]:
        args += [w.astype(f32), b.reshape(1, -1).astype(f32)]
    wt, bt = params["transform"]
    args += [wt.astype(f32), bt.reshape(1, -1).astype(f32)]
    args += [w0a.astype(f32), w0b.astype(f32), b0.reshape(1, -1).astype(f32)]
    for (w, b) in dnn_hidden[1:]:
        args += [w.astype(f32), b.reshape(1, -1).astype(f32)]
    wo, bo = params["dnn_out"]
    args += [wo.astype(f32), bo.reshape(1, -1).astype(f32)]

    n_pairs, out_size = pool_even.shape[0], wo.shape[1]
    kernel = _make_fused_kernel(n_gcn, len(dnn_hidden))
    return pl.pallas_call(
        kernel,
        out_shape=jax.ShapeDtypeStruct((n_pairs, out_size), jnp.float32),
        in_specs=[_VMEM] * len(args),
        out_specs=_VMEM,
        compiler_params=pltpu.CompilerParams(vmem_limit_bytes=64 << 20),
    )(*args)


# ---------------------------------------------------------------------------
# Pure-JAX reference (for correctness check only)
# ---------------------------------------------------------------------------
def reference_forward(params, x, a_hat, pool):
    h = x
    for (w, b) in params["gcn"]:
        h = jax.nn.relu(a_hat @ (h @ w) + b)
    wt, bt = params["transform"]
    mol = (pool @ h) @ wt + bt
    m, fp = mol.shape
    z = mol.reshape(m // 2, 2 * fp)
    for (w, b) in params["dnn_hidden"]:
        z = jax.nn.relu(z @ w + b)
    wo, bo = params["dnn_out"]
    return z @ wo + bo


# ---------------------------------------------------------------------------
# Parameter init (deterministic, synthetic — no checkpoint loading)
# ---------------------------------------------------------------------------
def init_params(key, in_dim, hidden, n_gcn, fp_size, dnn_layers, out_size):
    def lin(k, i, o):
        kw, kb = jax.random.split(k)
        return (0.1 * jax.random.normal(kw, (i, o), jnp.float32),
                0.1 * jax.random.normal(kb, (o,), jnp.float32))

    keys = iter(jax.random.split(key, n_gcn + len(dnn_layers) + 2))
    params = {"gcn": [], "dnn_hidden": []}
    d = in_dim
    for _ in range(n_gcn):
        params["gcn"].append(lin(next(keys), d, hidden))
        d = hidden
    params["transform"] = lin(next(keys), hidden, fp_size)
    d = 2 * fp_size
    for h in dnn_layers:
        params["dnn_hidden"].append(lin(next(keys), d, h))
        d = h
    params["dnn_out"] = lin(next(keys), d, out_size)
    return params


# ---------------------------------------------------------------------------
# Graph setup glue (adjacency normalization + reset_batch pooling matrices)
# ---------------------------------------------------------------------------
def build_graph(atom_nums):
    n_total = int(sum(atom_nums))
    rows, cols = [], []
    off = 0
    for n in atom_nums:  # simple chain per molecule (deterministic connectivity)
        for i in range(n - 1):
            rows += [off + i, off + i + 1]
            cols += [off + i + 1, off + i]
        off += n
    a = jnp.zeros((n_total, n_total), jnp.float32)
    if rows:
        a = a.at[jnp.array(rows), jnp.array(cols)].set(1.0)
    a_tilde = a + jnp.eye(n_total, dtype=jnp.float32)
    dinv = 1.0 / jnp.sqrt(a_tilde.sum(axis=1))
    a_hat = a_tilde * dinv[:, None] * dinv[None, :]

    # reset_batch: node i of molecule m contributes 1/atom_num[m] (mean readout).
    pool = jnp.zeros((len(atom_nums), n_total), jnp.float32)
    off = 0
    for m, n in enumerate(atom_nums):
        pool = pool.at[m, off:off + n].set(1.0 / n)
        off += n
    # Even / odd molecule of each AC pair (folds decompose_mol_pair into matmuls).
    pool_even, pool_odd = pool[0::2], pool[1::2]
    return a_hat, pool, pool_even, pool_odd


if __name__ == "__main__":
    # Small config consistent with the module's opt.args:
    #   GCNInputSize=16, GCNHiddenSize=32, GCNLayers=2, FPSize=32,
    #   DNNLayers=[64, 32], OutputSize=2
    atom_nums = [7, 5, 6, 6]          # 4 molecules -> 2 molecule pairs, 24 nodes total
    in_dim, hidden, n_gcn = 16, 32, 2
    fp_size, dnn_layers, out_size = 32, [64, 32], 2

    key = jax.random.PRNGKey(0)
    k_x, k_p = jax.random.split(key)

    a_hat, pool, pool_even, pool_odd = build_graph(atom_nums)
    n_nodes = a_hat.shape[0]
    x = jax.random.normal(k_x, (n_nodes, in_dim), jnp.float32)
    params = init_params(k_p, in_dim, hidden, n_gcn, fp_size, dnn_layers, out_size)

    pred = ac_pred_gcn_forward(params, x, a_hat, pool_even, pool_odd)
    jax.block_until_ready(pred)
    assert pred.shape == (len(atom_nums) // 2, out_size)

    ref = reference_forward(params, x, a_hat, pool)
    assert jnp.allclose(pred, ref, rtol=1e-4, atol=1e-4), (pred, ref)

    print("KERNEL_OK")
</pallas_src>

<mosaic_0001>
module attributes {stable_mosaic.version = 11 : i64} {
  func.func @kernel(%arg0: memref<24x24xf32, #tpu.memory_space<vmem>>, %arg1: memref<2x24xf32, #tpu.memory_space<vmem>>, %arg2: memref<2x24xf32, #tpu.memory_space<vmem>>, %arg3: memref<24x16xf32, #tpu.memory_space<vmem>>, %arg4: memref<16x32xf32, #tpu.memory_space<vmem>>, %arg5: memref<1x32xf32, #tpu.memory_space<vmem>>, %arg6: memref<32x32xf32, #tpu.memory_space<vmem>>, %arg7: memref<1x32xf32, #tpu.memory_space<vmem>>, %arg8: memref<32x32xf32, #tpu.memory_space<vmem>>, %arg9: memref<1x32xf32, #tpu.memory_space<vmem>>, %arg10: memref<32x64xf32, #tpu.memory_space<vmem>>, %arg11: memref<32x64xf32, #tpu.memory_space<vmem>>, %arg12: memref<1x64xf32, #tpu.memory_space<vmem>>, %arg13: memref<64x32xf32, #tpu.memory_space<vmem>>, %arg14: memref<1x32xf32, #tpu.memory_space<vmem>>, %arg15: memref<32x2xf32, #tpu.memory_space<vmem>>, %arg16: memref<1x2xf32, #tpu.memory_space<vmem>>, %arg17: memref<2x2xf32, #tpu.memory_space<vmem>>) attributes {dimension_semantics = [], scalar_prefetch = 0 : i64, scratch_operands = 0 : i64, tpu.core_type = #tpu.core_type<tc>} {
    %c0 = arith.constant 0 : index
    %c0_0 = arith.constant 0 : index
    %0 = vector.load %arg0[%c0, %c0_0] : memref<24x24xf32, #tpu.memory_space<vmem>>, vector<24x24xf32>
    %c0_1 = arith.constant 0 : index
    %c0_2 = arith.constant 0 : index
    %1 = vector.load %arg1[%c0_1, %c0_2] : memref<2x24xf32, #tpu.memory_space<vmem>>, vector<2x24xf32>
    %c0_3 = arith.constant 0 : index
    %c0_4 = arith.constant 0 : index
    %2 = vector.load %arg2[%c0_3, %c0_4] : memref<2x24xf32, #tpu.memory_space<vmem>>, vector<2x24xf32>
    %c0_5 = arith.constant 0 : index
    %c0_6 = arith.constant 0 : index
    %3 = vector.load %arg3[%c0_5, %c0_6] : memref<24x16xf32, #tpu.memory_space<vmem>>, vector<24x16xf32>
    %c0_7 = arith.constant 0 : index
    %c0_8 = arith.constant 0 : index
    %4 = vector.load %arg4[%c0_7, %c0_8] : memref<16x32xf32, #tpu.memory_space<vmem>>, vector<16x32xf32>
    %cst = arith.constant dense<0.000000e+00> : vector<24x32xf32>
    %5 = tpu.matmul %3, %4, %cst {dimension_numbers = #tpu.dot_dimension_numbers<[1], [0], [0], [1], [0, 0, 1, 1], [], []>} : vector<24x16xf32>, vector<16x32xf32>, vector<24x32xf32> -> vector<24x32xf32>
    %cst_9 = arith.constant dense<0.000000e+00> : vector<24x32xf32>
    %6 = tpu.matmul %0, %5, %cst_9 {dimension_numbers = #tpu.dot_dimension_numbers<[1], [0], [0], [1], [0, 0, 1, 1], [], []>} : vector<24x24xf32>, vector<24x32xf32>, vector<24x32xf32> -> vector<24x32xf32>
    %c0_10 = arith.constant 0 : index
    %c0_11 = arith.constant 0 : index
    %7 = vector.load %arg5[%c0_10, %c0_11] : memref<1x32xf32, #tpu.memory_space<vmem>>, vector<1x32xf32>
    %8 = vector.broadcast %7 : vector<1x32xf32> to vector<24x32xf32>
    %9 = arith.addf %6, %8 : vector<24x32xf32>
    %cst_12 = arith.constant 0.000000e+00 : f32
    %10 = vector.broadcast %cst_12 : f32 to vector<24x32xf32>
    %11 = arith.maximumf %9, %10 : vector<24x32xf32>
    %c0_13 = arith.constant 0 : index
    %c0_14 = arith.constant 0 : index
    %12 = vector.load %arg6[%c0_13, %c0_14] : memref<32x32xf32, #tpu.memory_space<vmem>>, vector<32x32xf32>
    %cst_15 = arith.constant dense<0.000000e+00> : vector<24x32xf32>
    %13 = tpu.matmul %11, %12, %cst_15 {dimension_numbers = #tpu.dot_dimension_numbers<[1], [0], [0], [1], [0, 0, 1, 1], [], []>} : vector<24x32xf32>, vector<32x32xf32>, vector<24x32xf32> -> vector<24x32xf32>
    %cst_16 = arith.constant dense<0.000000e+00> : vector<24x32xf32>
    %14 = tpu.matmul %0, %13, %cst_16 {dimension_numbers = #tpu.dot_dimension_numbers<[1], [0], [0], [1], [0, 0, 1, 1], [], []>} : vector<24x24xf32>, vector<24x32xf32>, vector<24x32xf32> -> vector<24x32xf32>
    %c0_17 = arith.constant 0 : index
    %c0_18 = arith.constant 0 : index
    %15 = vector.load %arg7[%c0_17, %c0_18] : memref<1x32xf32, #tpu.memory_space<vmem>>, vector<1x32xf32>
    %16 = vector.broadcast %15 : vector<1x32xf32> to vector<24x32xf32>
    %17 = arith.addf %14, %16 : vector<24x32xf32>
    %cst_19 = arith.constant 0.000000e+00 : f32
    %18 = vector.broadcast %cst_19 : f32 to vector<24x32xf32>
    %19 = arith.maximumf %17, %18 : vector<24x32xf32>
    %c0_20 = arith.constant 0 : index
    %c0_21 = arith.constant 0 : index
    %20 = vector.load %arg8[%c0_20, %c0_21] : memref<32x32xf32, #tpu.memory_space<vmem>>, vector<32x32xf32>
    %c0_22 = arith.constant 0 : index
    %c0_23 = arith.constant 0 : index
    %21 = vector.load %arg9[%c0_22, %c0_23] : memref<1x32xf32, #tpu.memory_space<vmem>>, vector<1x32xf32>
    %cst_24 = arith.constant dense<0.000000e+00> : vector<2x32xf32>
    %22 = tpu.matmul %1, %19, %cst_24 {dimension_numbers = #tpu.dot_dimension_numbers<[1], [0], [0], [1], [0, 0, 1, 1], [], []>} : vector<2x24xf32>, vector<24x32xf32>, vector<2x32xf32> -> vector<2x32xf32>
    %cst_25 = arith.constant dense<0.000000e+00> : vector<2x32xf32>
    %23 = tpu.matmul %22, %20, %cst_25 {dimension_numbers = #tpu.dot_dimension_numbers<[1], [0], [0], [1], [0, 0, 1, 1], [], []>} : vector<2x32xf32>, vector<32x32xf32>, vector<2x32xf32> -> vector<2x32xf32>
    %24 = vector.broadcast %21 : vector<1x32xf32> to vector<2x32xf32>
    %25 = arith.addf %23, %24 : vector<2x32xf32>
    %cst_26 = arith.constant dense<0.000000e+00> : vector<2x32xf32>
    %26 = tpu.matmul %2, %19, %cst_26 {dimension_numbers = #tpu.dot_dimension_numbers<[1], [0], [0], [1], [0, 0, 1, 1], [], []>} : vector<2x24xf32>, vector<24x32xf32>, vector<2x32xf32> -> vector<2x32xf32>
    %cst_27 = arith.constant dense<0.000000e+00> : vector<2x32xf32>
    %27 = tpu.matmul %26, %20, %cst_27 {dimension_numbers = #tpu.dot_dimension_numbers<[1], [0], [0], [1], [0, 0, 1, 1], [], []>} : vector<2x32xf32>, vector<32x32xf32>, vector<2x32xf32> -> vector<2x32xf32>
    %28 = vector.broadcast %21 : vector<1x32xf32> to vector<2x32xf32>
    %29 = arith.addf %27, %28 : vector<2x32xf32>
    %c0_28 = arith.constant 0 : index
    %c0_29 = arith.constant 0 : index
    %30 = vector.load %arg10[%c0_28, %c0_29] : memref<32x64xf32, #tpu.memory_space<vmem>>, vector<32x64xf32>
    %cst_30 = arith.constant dense<0.000000e+00> : vector<2x64xf32>
    %31 = tpu.matmul %25, %30, %cst_30 {dimension_numbers = #tpu.dot_dimension_numbers<[1], [0], [0], [1], [0, 0, 1, 1], [], []>} : vector<2x32xf32>, vector<32x64xf32>, vector<2x64xf32> -> vector<2x64xf32>
    %c0_31 = arith.constant 0 : index
    %c0_32 = arith.constant 0 : index
    %32 = vector.load %arg11[%c0_31, %c0_32] : memref<32x64xf32, #tpu.memory_space<vmem>>, vector<32x64xf32>
    %cst_33 = arith.constant dense<0.000000e+00> : vector<2x64xf32>
    %33 = tpu.matmul %29, %32, %cst_33 {dimension_numbers = #tpu.dot_dimension_numbers<[1], [0], [0], [1], [0, 0, 1, 1], [], []>} : vector<2x32xf32>, vector<32x64xf32>, vector<2x64xf32> -> vector<2x64xf32>
    %34 = arith.addf %31, %33 : vector<2x64xf32>
    %c0_34 = arith.constant 0 : index
    %c0_35 = arith.constant 0 : index
    %35 = vector.load %arg12[%c0_34, %c0_35] : memref<1x64xf32, #tpu.memory_space<vmem>>, vector<1x64xf32>
    %36 = vector.broadcast %35 : vector<1x64xf32> to vector<2x64xf32>
    %37 = arith.addf %34, %36 : vector<2x64xf32>
    %cst_36 = arith.constant 0.000000e+00 : f32
    %38 = vector.broadcast %cst_36 : f32 to vector<2x64xf32>
    %39 = arith.maximumf %37, %38 : vector<2x64xf32>
    %c0_37 = arith.constant 0 : index
    %c0_38 = arith.constant 0 : index
    %40 = vector.load %arg13[%c0_37, %c0_38] : memref<64x32xf32, #tpu.memory_space<vmem>>, vector<64x32xf32>
    %cst_39 = arith.constant dense<0.000000e+00> : vector<2x32xf32>
    %41 = tpu.matmul %39, %40, %cst_39 {dimension_numbers = #tpu.dot_dimension_numbers<[1], [0], [0], [1], [0, 0, 1, 1], [], []>} : vector<2x64xf32>, vector<64x32xf32>, vector<2x32xf32> -> vector<2x32xf32>
    %c0_40 = arith.constant 0 : index
    %c0_41 = arith.constant 0 : index
    %42 = vector.load %arg14[%c0_40, %c0_41] : memref<1x32xf32, #tpu.memory_space<vmem>>, vector<1x32xf32>
    %43 = vector.broadcast %42 : vector<1x32xf32> to vector<2x32xf32>
    %44 = arith.addf %41, %43 : vector<2x32xf32>
    %cst_42 = arith.constant 0.000000e+00 : f32
    %45 = vector.broadcast %cst_42 : f32 to vector<2x32xf32>
    %46 = arith.maximumf %44, %45 : vector<2x32xf32>
    %c0_43 = arith.constant 0 : index
    %c0_44 = arith.constant 0 : index
    %47 = vector.load %arg15[%c0_43, %c0_44] : memref<32x2xf32, #tpu.memory_space<vmem>>, vector<32x2xf32>
    %cst_45 = arith.constant dense<0.000000e+00> : vector<2x2xf32>
    %48 = tpu.matmul %46, %47, %cst_45 {dimension_numbers = #tpu.dot_dimension_numbers<[1], [0], [0], [1], [0, 0, 1, 1], [], []>} : vector<2x32xf32>, vector<32x2xf32>, vector<2x2xf32> -> vector<2x2xf32>
    %c0_46 = arith.constant 0 : index
    %c0_47 = arith.constant 0 : index
    %49 = vector.load %arg16[%c0_46, %c0_47] : memref<1x2xf32, #tpu.memory_space<vmem>>, vector<1x2xf32>
    %50 = vector.broadcast %49 : vector<1x2xf32> to vector<2x2xf32>
    %51 = arith.addf %48, %50 : vector<2x2xf32>
    %c0_48 = arith.constant 0 : index
    %c0_49 = arith.constant 0 : index
    %52 = vector.load %arg17[%c0_48, %c0_49] : memref<2x2xf32, #tpu.memory_space<vmem>>, vector<2x2xf32>
    tpu.vector_store %arg17[%c0_48, %c0_49], %51 {strides = array<i32>} : memref<2x2xf32, #tpu.memory_space<vmem>>, vector<2x2xf32>,
    return
  }
}

</mosaic_0001>

<llo_original>
// kernel: tpu_custom_call.1
$region0: #{tpu_custom_call.1}
  #allocation0 [shape = 'u32[]', space=smem, size = 0x4, offset = 0x4, fixed_abs, tag = 'smem constant byte address 0x4 - core index']
  #allocation1 [shape = 'u32[72,128]{1,0:T(1,128)}', space=vmem, size = 0x9000, scoped, tag = 'internal scratch']
  %s0 = inlined_call_operand.hbm [shape: f32[24,24], index: 0, kind: input, shape index: {}]
  %s1 = inlined_call_operand.vmem [shape: f32[2,24], index: 1, kind: input, shape index: {}]
  %s2 = inlined_call_operand.vmem [shape: f32[2,24], index: 2, kind: input, shape index: {}]
  %s3 = inlined_call_operand.vmem [shape: f32[24,16], index: 3, kind: input, shape index: {}]
  %s4 = inlined_call_operand.hbm [shape: f32[16,32], index: 4, kind: input, shape index: {}]
  %s5 = inlined_call_operand.vmem [shape: f32[1,32], index: 5, kind: input, shape index: {}]
  %s6 = inlined_call_operand.vmem [shape: f32[32,32], index: 6, kind: input, shape index: {}]
  %s7 = inlined_call_operand.vmem [shape: f32[1,32], index: 7, kind: input, shape index: {}]
  %s8 = inlined_call_operand.vmem [shape: f32[32,32], index: 8, kind: input, shape index: {}]
  %s9 = inlined_call_operand.vmem [shape: f32[1,32], index: 9, kind: input, shape index: {}]
  %s10 = inlined_call_operand.vmem [shape: f32[32,64], index: 10, kind: input, shape index: {}]
  %s11 = inlined_call_operand.vmem [shape: f32[32,64], index: 11, kind: input, shape index: {}]
  %s12 = inlined_call_operand.vmem [shape: f32[1,64], index: 12, kind: input, shape index: {}]
  %s13 = inlined_call_operand.vmem [shape: f32[64,32], index: 13, kind: input, shape index: {}]
  %s14 = inlined_call_operand.vmem [shape: f32[1,32], index: 14, kind: input, shape index: {}]
  %s15 = inlined_call_operand.vmem [shape: f32[32,2], index: 15, kind: input, shape index: {}]
  %s16 = inlined_call_operand.vmem [shape: f32[1,2], index: 16, kind: input, shape index: {}]
  %s17 = inlined_call_operand.hbm [shape: f32[2,2], index: 17, kind: output, shape index: {}]
  %s18 = sld [smem:[#allocation0]]
  $region86: #{tpu_custom_call.1} parent=0
    _
  %s20 = ssub.s32 1, %s18
  %s21 = scalar_select 0, %s20, %s18
  $region1: #{tpu_custom_call.1} parent=0
    #allocation2 [shape = 'u8[12288]{0}', space=vmem, size = 0x3000, scoped, tag = 'input window, operand 0, single buffered']
    #allocation3 [shape = 's32[1]{0}', space=sflag, size = 0x4, scoped, tag = 'scoped memory for tpu_custom_call.1']
    #allocation4 [shape = 's32[1]{0}', space=sflag, size = 0x4, scoped, tag = 'scoped memory for tpu_custom_call.1']
    #allocation5 [shape = 'u8[8192]{0}', space=vmem, size = 0x2000, scoped, tag = 'input window, operand 4, single buffered']
    #allocation6 [shape = 's32[1]{0}', space=sflag, size = 0x4, scoped, tag = 'scoped memory for tpu_custom_call.1']
    #allocation7 [shape = 'u8[1024]{0}', space=vmem, size = 0x400, scoped, tag = 'output window, operand 0, single buffered']
    %22 = vsyncpa [#allocation3], 0
    %23 = vsyncpa [#allocation6], 0
    %24 = vsyncpa [#allocation4], 0
    // Predicated region
    $region2: #{tpu_custom_call.1} parent=1 // pred_check
      _
    $region3: #{tpu_custom_call.1} parent=1 // pred_check_branch
      %26 = sbr.rel (0) target = $region5
    $region4: #{tpu_custom_call.1} parent=1 // pred_region
      %28 = vsyncadd [#allocation3], 0
      %s29 = sshll.u32 %s0, 4
      %s30 = int_to_ptr.hbm [resolvable:$true] %s29
      %s31 = sshll.u32 [#allocation2], 4
      %s32 = int_to_ptr.vmem [resolvable:$true] %s31
      %37 = dma.hbm_to_vmem [thread:$0]  %s30, 384, %s32, [#allocation3], 128, 128, 8
    $region5: #{tpu_custom_call.1} parent=1 // pred_fallthru
      _
    // Predicated region
    $region6: #{tpu_custom_call.1} parent=1 // pred_check
      _
    $region7: #{tpu_custom_call.1} parent=1 // pred_check_branch
      %39 = sbr.rel (0) target = $region9
    $region8: #{tpu_custom_call.1} parent=1 // pred_region
      _
    $region9: #{tpu_custom_call.1} parent=1 // pred_fallthru
      _
    // Predicated region
    $region10: #{tpu_custom_call.1} parent=1 // pred_check
      _
    $region11: #{tpu_custom_call.1} parent=1 // pred_check_branch
      %41 = sbr.rel (0) target = $region13
    $region12: #{tpu_custom_call.1} parent=1 // pred_region
      _
    $region13: #{tpu_custom_call.1} parent=1 // pred_fallthru
      _
    // Predicated region
    $region14: #{tpu_custom_call.1} parent=1 // pred_check
      _
    $region15: #{tpu_custom_call.1} parent=1 // pred_check_branch
      %43 = sbr.rel (0) target = $region17
    $region16: #{tpu_custom_call.1} parent=1 // pred_region
      _
    $region17: #{tpu_custom_call.1} parent=1 // pred_fallthru
      _
    // Predicated region
    $region18: #{tpu_custom_call.1} parent=1 // pred_check
      _
    $region19: #{tpu_custom_call.1} parent=1 // pred_check_branch
      %45 = sbr.rel (0) target = $region21
    $region20: #{tpu_custom_call.1} parent=1 // pred_region
      %47 = vsyncadd [#allocation6], 0
      %s48 = sshll.u32 %s4, 4
      %s49 = int_to_ptr.hbm [resolvable:$true] %s48
      %s50 = sshll.u32 [#allocation5], 4
      %s51 = int_to_ptr.vmem [resolvable:$true] %s50
      %56 = dma.hbm_to_vmem [thread:$0]  %s49, 256, %s51, [#allocation6], 128, 128, 8
    $region21: #{tpu_custom_call.1} parent=1 // pred_fallthru
      _
    // Predicated region
    $region22: #{tpu_custom_call.1} parent=1 // pred_check
      _
    $region23: #{tpu_custom_call.1} parent=1 // pred_check_branch
      %58 = sbr.rel (0) target = $region25
    $region24: #{tpu_custom_call.1} parent=1 // pred_region
      _
    $region25: #{tpu_custom_call.1} parent=1 // pred_fallthru
      _
    // Predicated region
    $region26: #{tpu_custom_call.1} parent=1 // pred_check
      _
    $region27: #{tpu_custom_call.1} parent=1 // pred_check_branch
      %60 = sbr.rel (0) target = $region29
    $region28: #{tpu_custom_call.1} parent=1 // pred_region
      _
    $region29: #{tpu_custom_call.1} parent=1 // pred_fallthru
      _
    // Predicated region
    $region30: #{tpu_custom_call.1} parent=1 // pred_check
      _
    $region31: #{tpu_custom_call.1} parent=1 // pred_check_branch
      %62 = sbr.rel (0) target = $region33
    $region32: #{tpu_custom_call.1} parent=1 // pred_region
      _
    $region33: #{tpu_custom_call.1} parent=1 // pred_fallthru
      _
    // Predicated region
    $region34: #{tpu_custom_call.1} parent=1 // pred_check
      _
    $region35: #{tpu_custom_call.1} parent=1 // pred_check_branch
      %64 = sbr.rel (0) target = $region37
    $region36: #{tpu_custom_call.1} parent=1 // pred_region
      _
    $region37: #{tpu_custom_call.1} parent=1 // pred_fallthru
      _
    // Predicated region
    $region38: #{tpu_custom_call.1} parent=1 // pred_check
      _
    $region39: #{tpu_custom_call.1} parent=1 // pred_check_branch
      %66 = sbr.rel (0) target = $region41
    $region40: #{tpu_custom_call.1} parent=1 // pred_region
      _
    $region41: #{tpu_custom_call.1} parent=1 // pred_fallthru
      _
    // Predicated region
    $region42: #{tpu_custom_call.1} parent=1 // pred_check
      _
    $region43: #{tpu_custom_call.1} parent=1 // pred_check_branch
      %68 = sbr.rel (0) target = $region45
    $region44: #{tpu_custom_call.1} parent=1 // pred_region
      _
    $region45: #{tpu_custom_call.1} parent=1 // pred_fallthru
      _
    // Predicated region
    $region46: #{tpu_custom_call.1} parent=1 // pred_check
      _
    $region47: #{tpu_custom_call.1} parent=1 // pred_check_branch
      %70 = sbr.rel (0) target = $region49
    $region48: #{tpu_custom_call.1} parent=1 // pred_region
      _
    $region49: #{tpu_custom_call.1} parent=1 // pred_fallthru
      _
    // Predicated region
    $region50: #{tpu_custom_call.1} parent=1 // pred_check
      _
    $region51: #{tpu_custom_call.1} parent=1 // pred_check_branch
      %72 = sbr.rel (0) target = $region53
    $region52: #{tpu_custom_call.1} parent=1 // pred_region
      _
    $region53: #{tpu_custom_call.1} parent=1 // pred_fallthru
      _
    // Predicated region
    $region54: #{tpu_custom_call.1} parent=1 // pred_check
      _
    $region55: #{tpu_custom_call.1} parent=1 // pred_check_branch
      %74 = sbr.rel (0) target = $region57
    $region56: #{tpu_custom_call.1} parent=1 // pred_region
      _
    $region57: #{tpu_custom_call.1} parent=1 // pred_fallthru
      _
    // Predicated region
    $region58: #{tpu_custom_call.1} parent=1 // pred_check
      _
    $region59: #{tpu_custom_call.1} parent=1 // pred_check_branch
      %76 = sbr.rel (0) target = $region61
    $region60: #{tpu_custom_call.1} parent=1 // pred_region
      _
    $region61: #{tpu_custom_call.1} parent=1 // pred_fallthru
      _
    // Predicated region
    $region62: #{tpu_custom_call.1} parent=1 // pred_check
      _
    $region63: #{tpu_custom_call.1} parent=1 // pred_check_branch
      %78 = sbr.rel (0) target = $region65
    $region64: #{tpu_custom_call.1} parent=1 // pred_region
      _
    $region65: #{tpu_custom_call.1} parent=1 // pred_fallthru
      _
    // Predicated region
    $region66: #{tpu_custom_call.1} parent=1 // pred_check
      _
    $region67: #{tpu_custom_call.1} parent=1 // pred_check_branch
      %80 = sbr.rel (0) target = $region69
    $region68: #{tpu_custom_call.1} parent=1 // pred_region
      _
    $region69: #{tpu_custom_call.1} parent=1 // pred_fallthru
      _
    // Predicated region
    $region70: #{tpu_custom_call.1} parent=1 // pred_check
      _
    $region71: #{tpu_custom_call.1} parent=1 // pred_check_branch
      %82 = sbr.rel (0) target = $region73
    $region72: #{tpu_custom_call.1} parent=1 // pred_region
      %84 = dma.done [#allocation3], 384
    $region73: #{tpu_custom_call.1} parent=1 // pred_fallthru
      _
    // Predicated region
    $region74: #{tpu_custom_call.1} parent=1 // pred_check
      _
    $region75: #{tpu_custom_call.1} parent=1 // pred_check_branch
      %86 = sbr.rel (0) target = $region77
    $region76: #{tpu_custom_call.1} parent=1 // pred_region
      %88 = dma.done [#allocation6], 256
    $region77: #{tpu_custom_call.1} parent=1 // pred_fallthru
      _
    %v89 = vld [vmem:[#allocation2] sm:$0xff]
    %v90 = vld [vmem:[#allocation2 + $0x8] sm:$0xff]
    %v91 = vld [vmem:[#allocation2 + $0x10] sm:$0xff]
    %v92 = vld [vmem:[%s1] sm:$0x3]
    %v93 = vld [vmem:[%s2] sm:$0x3]
    %v94 = vld [vmem:[%s3] sm:$0xff]
    %v95 = vld [vmem:[%s3 + $0x8] sm:$0xff]
    %v96 = vld [vmem:[%s3 + $0x10] sm:$0xff]
    %v97 = vld [vmem:[#allocation5] sm:$0xff]
    %v98 = vld [vmem:[#allocation5 + $0x8] sm:$0xff]
    %vm99 = vcmask 130048
    %v101 = vsel %vm99, %v94, 0
    %v104 = vsel %vm99, %v95, 0
    %v107 = vsel %vm99, %v96, 0
    %109 = vmatpush.msra.mxu0 0.0
    %110 = vmatpush.msra.mxu0 0.0
    %111 = vmatpush.msra.mxu0 0.0
    %112 = vmatpush.msra.mxu0 0.0
    %113 = vmatpush.msra.mxu0 0.0
    %114 = vmatpush.msra.mxu0 0.0
    %115 = vmatpush.msra.mxu0 0.0
    %116 = vmatpush.msra.mxu0 0.0
    %117 = vmatpush.msra.mxu0 0.0
    %118 = vmatpush.msra.mxu0 0.0
    %119 = vmatpush.msra.mxu0 0.0
    %120 = vmatpush.msra.mxu0 0.0
    %121 = vmatpush.msra.mxu0 0.0
    %122 = vmatpush.msra.mxu0 0.0
    %123 = vmatpush.msra.mxu0 %v98
    %124 = vmatpush.msra.mxu0 %v97
    %125 = vmatmul.f32.gmra.mxu0 %v101
    %v126 = vpop.f32.mrf.mxu0
    %v127 = vadd.f32 0.0, %v126
    %128 = vmatmul.f32.gmra.mxu0 %v104
    %v129 = vpop.f32.mrf.mxu0
    %v130 = vadd.f32 0.0, %v129
    %131 = vmatmul.f32.gmra.mxu0 %v107
    %v132 = vpop.f32.mrf.mxu0
    %v133 = vadd.f32 0.0, %v132
    %134 = vdwg.mxu0
    %v135 = vld [vmem:[%s5] sm:$0x1]
    %v137 = vperm.slane %v135, 0
    %vm139 = vcmask 195584
    %v141 = vsel %vm139, %v89, 0
    %v144 = vsel %vm139, %v90, 0
    %v147 = vsel %vm139, %v91, 0
    %149 = vmatpush.msra.mxu0 0.0
    %150 = vmatpush.msra.mxu0 0.0
    %151 = vmatpush.msra.mxu0 0.0
    %152 = vmatpush.msra.mxu0 0.0
    %153 = vmatpush.msra.mxu0 0.0
    %154 = vmatpush.msra.mxu0 0.0
    %155 = vmatpush.msra.mxu0 0.0
    %156 = vmatpush.msra.mxu0 0.0
    %157 = vmatpush.msra.mxu0 0.0
    %158 = vmatpush.msra.mxu0 0.0
    %159 = vmatpush.msra.mxu0 0.0
    %160 = vmatpush.msra.mxu0 0.0
    %161 = vmatpush.msra.mxu0 0.0
    %162 = vmatpush.msra.mxu0 %v133
    %163 = vmatpush.msra.mxu0 %v130
    %164 = vmatpush.msra.mxu0 %v127
    %165 = vmatmul.f32.gmra.mxu0 %v141
    %v166 = vpop.f32.mrf.mxu0
    %v167 = vadd.f32 %v137, %v166
    %168 = vmatmul.f32.gmra.mxu0 %v144
    %v169 = vpop.f32.mrf.mxu0
    %v170 = vadd.f32 %v137, %v169
    %171 = vmatmul.f32.gmra.mxu0 %v147
    %v172 = vpop.f32.mrf.mxu0
    %v173 = vadd.f32 %v137, %v172
    %174 = vdwg.mxu0
    %v175 = vmax.f32 %v167, 0.0
    %v176 = vmax.f32 %v170, 0.0
    %v177 = vmax.f32 %v173, 0.0
    %v178 = vld [vmem:[%s6] sm:$0xff]
    %v179 = vld [vmem:[%s6 + $0x8] sm:$0xff]
    %v180 = vld [vmem:[%s6 + $0x10] sm:$0xff]
    %v181 = vld [vmem:[%s6 + $0x18] sm:$0xff]
    %vm182 = vcmask 261120
    %v184 = vsel %vm182, %v175, 0
    %v187 = vsel %vm182, %v176, 0
    %v190 = vsel %vm182, %v177, 0
    %192 = vmatpush.msra.mxu0 0.0
    %193 = vmatpush.msra.mxu0 0.0
    %194 = vmatpush.msra.mxu0 0.0
    %195 = vmatpush.msra.mxu0 0.0
    %196 = vmatpush.msra.mxu0 0.0
    %197 = vmatpush.msra.mxu0 0.0
    %198 = vmatpush.msra.mxu0 0.0
    %199 = vmatpush.msra.mxu0 0.0
    %200 = vmatpush.msra.mxu0 0.0
    %201 = vmatpush.msra.mxu0 0.0
    %202 = vmatpush.msra.mxu0 0.0
    %203 = vmatpush.msra.mxu0 0.0
    %204 = vmatpush.msra.mxu0 %v181
    %205 = vmatpush.msra.mxu0 %v180
    %206 = vmatpush.msra.mxu0 %v179
    %207 = vmatpush.msra.mxu0 %v178
    %208 = vmatmul.f32.gmra.mxu0 %v184
    %v209 = vpop.f32.mrf.mxu0
    %v210 = vadd.f32 0.0, %v209
    %211 = vmatmul.f32.gmra.mxu0 %v187
    %v212 = vpop.f32.mrf.mxu0
    %v213 = vadd.f32 0.0, %v212
    %214 = vmatmul.f32.gmra.mxu0 %v190
    %v215 = vpop.f32.mrf.mxu0
    %v216 = vadd.f32 0.0, %v215
    %217 = vdwg.mxu0
    %v218 = vld [vmem:[%s7] sm:$0x1]
    %v220 = vperm.slane %v218, 0
    %222 = vmatpush.msra.mxu0 0.0
    %223 = vmatpush.msra.mxu0 0.0
    %224 = vmatpush.msra.mxu0 0.0
    %225 = vmatpush.msra.mxu0 0.0
    %226 = vmatpush.msra.mxu0 0.0
    %227 = vmatpush.msra.mxu0 0.0
    %228 = vmatpush.msra.mxu0 0.0
    %229 = vmatpush.msra.mxu0 0.0
    %230 = vmatpush.msra.mxu0 0.0
    %231 = vmatpush.msra.mxu0 0.0
    %232 = vmatpush.msra.mxu0 0.0
    %233 = vmatpush.msra.mxu0 0.0
    %234 = vmatpush.msra.mxu0 0.0
    %235 = vmatpush.msra.mxu0 %v216
    %236 = vmatpush.msra.mxu0 %v213
    %237 = vmatpush.msra.mxu0 %v210
    %238 = vmatmul.f32.gmra.mxu0 %v141
    %v239 = vpop.f32.mrf.mxu0
    %v240 = vadd.f32 %v220, %v239
    %241 = vmatmul.f32.gmra.mxu0 %v144
    %v242 = vpop.f32.mrf.mxu0
    %v243 = vadd.f32 %v220, %v242
    %244 = vmatmul.f32.gmra.mxu0 %v147
    %v245 = vpop.f32.mrf.mxu0
    %v246 = vadd.f32 %v220, %v245
    %247 = vdwg.mxu0
    %v248 = vmax.f32 %v240, 0.0
    %v249 = vmax.f32 %v243, 0.0
    %v250 = vmax.f32 %v246, 0.0
    %v251 = vld [vmem:[%s8] sm:$0xff]
    %v252 = vld [vmem:[%s8 + $0x8] sm:$0xff]
    %v253 = vld [vmem:[%s8 + $0x10] sm:$0xff]
    %v254 = vld [vmem:[%s8 + $0x18] sm:$0xff]
    %v255 = vld [vmem:[%s9] sm:$0x1]
    %v257 = vsel %vm139, %v92, 0
    %259 = vmatpush.msra.mxu0 0.0
    %260 = vmatpush.msra.mxu0 0.0
    %261 = vmatpush.msra.mxu0 0.0
    %262 = vmatpush.msra.mxu0 0.0
    %263 = vmatpush.msra.mxu0 0.0
    %264 = vmatpush.msra.mxu0 0.0
    %265 = vmatpush.msra.mxu0 0.0
    %266 = vmatpush.msra.mxu0 0.0
    %267 = vmatpush.msra.mxu0 0.0
    %268 = vmatpush.msra.mxu0 0.0
    %269 = vmatpush.msra.mxu0 0.0
    %270 = vmatpush.msra.mxu0 0.0
    %271 = vmatpush.msra.mxu0 0.0
    %272 = vmatpush.msra.mxu0 %v250
    %273 = vmatpush.msra.mxu0 %v249
    %274 = vmatpush.msra.mxu0 %v248
    %275 = vmatmul.f32.gmra.mxu0 %v257
    %v276 = vpop.f32.mrf.mxu0
    %v277 = vadd.f32 0.0, %v276
    %278 = vdwg.mxu0
    %v280 = vperm.slane %v255, 0
    %v283 = vsel %vm182, %v277, 0
    %285 = vmatpush.msra.mxu0 0.0
    %286 = vmatpush.msra.mxu0 0.0
    %287 = vmatpush.msra.mxu0 0.0
    %288 = vmatpush.msra.mxu0 0.0
    %289 = vmatpush.msra.mxu0 0.0
    %290 = vmatpush.msra.mxu0 0.0
    %291 = vmatpush.msra.mxu0 0.0
    %292 = vmatpush.msra.mxu0 0.0
    %293 = vmatpush.msra.mxu0 0.0
    %294 = vmatpush.msra.mxu0 0.0
    %295 = vmatpush.msra.mxu0 0.0
    %296 = vmatpush.msra.mxu0 0.0
    %297 = vmatpush.msra.mxu0 %v254
    %298 = vmatpush.msra.mxu0 %v253
    %299 = vmatpush.msra.mxu0 %v252
    %300 = vmatpush.msra.mxu0 %v251
    %301 = vmatmul.f32.gmra.mxu0 %v283
    %v302 = vpop.f32.mrf.mxu0
    %v303 = vadd.f32 %v280, %v302
    %304 = vdwg.mxu0
    %v306 = vsel %vm139, %v93, 0
    %308 = vmatpush.msra.mxu0 0.0
    %309 = vmatpush.msra.mxu0 0.0
    %310 = vmatpush.msra.mxu0 0.0
    %311 = vmatpush.msra.mxu0 0.0
    %312 = vmatpush.msra.mxu0 0.0
    %313 = vmatpush.msra.mxu0 0.0
    %314 = vmatpush.msra.mxu0 0.0
    %315 = vmatpush.msra.mxu0 0.0
    %316 = vmatpush.msra.mxu0 0.0
    %317 = vmatpush.msra.mxu0 0.0
    %318 = vmatpush.msra.mxu0 0.0
    %319 = vmatpush.msra.mxu0 0.0
    %320 = vmatpush.msra.mxu0 0.0
    %321 = vmatpush.msra.mxu0 %v250
    %322 = vmatpush.msra.mxu0 %v249
    %323 = vmatpush.msra.mxu0 %v248
    %324 = vmatmul.f32.gmra.mxu0 %v306
    %v325 = vpop.f32.mrf.mxu0
    %v326 = vadd.f32 0.0, %v325
    %327 = vdwg.mxu0
    %v329 = vsel %vm182, %v326, 0
    %331 = vmatpush.msra.mxu0 0.0
    %332 = vmatpush.msra.mxu0 0.0
    %333 = vmatpush.msra.mxu0 0.0
    %334 = vmatpush.msra.mxu0 0.0
    %335 = vmatpush.msra.mxu0 0.0
    %336 = vmatpush.msra.mxu0 0.0
    %337 = vmatpush.msra.mxu0 0.0
    %338 = vmatpush.msra.mxu0 0.0
    %339 = vmatpush.msra.mxu0 0.0
    %340 = vmatpush.msra.mxu0 0.0
    %341 = vmatpush.msra.mxu0 0.0
    %342 = vmatpush.msra.mxu0 0.0
    %343 = vmatpush.msra.mxu0 %v254
    %344 = vmatpush.msra.mxu0 %v253
    %345 = vmatpush.msra.mxu0 %v252
    %346 = vmatpush.msra.mxu0 %v251
    %347 = vmatmul.f32.gmra.mxu0 %v329
    %v348 = vpop.f32.mrf.mxu0
    %v349 = vadd.f32 %v280, %v348
    %350 = vdwg.mxu0
    %v351 = vld [vmem:[%s10] sm:$0xff]
    %v352 = vld [vmem:[%s10 + $0x8] sm:$0xff]
    %v353 = vld [vmem:[%s10 + $0x10] sm:$0xff]
    %v354 = vld [vmem:[%s10 + $0x18] sm:$0xff]
    %v355 = vld [vmem:[%s11] sm:$0xff]
    %v356 = vld [vmem:[%s11 + $0x8] sm:$0xff]
    %v357 = vld [vmem:[%s11 + $0x10] sm:$0xff]
    %v358 = vld [vmem:[%s11 + $0x18] sm:$0xff]
    %v360 = vsel %vm182, %v349, 0
    %362 = vmatpush.msra.mxu0 0.0
    %363 = vmatpush.msra.mxu0 0.0
    %364 = vmatpush.msra.mxu0 0.0
    %365 = vmatpush.msra.mxu0 0.0
    %366 = vmatpush.msra.mxu0 0.0
    %367 = vmatpush.msra.mxu0 0.0
    %368 = vmatpush.msra.mxu0 0.0
    %369 = vmatpush.msra.mxu0 0.0
    %370 = vmatpush.msra.mxu0 0.0
    %371 = vmatpush.msra.mxu0 0.0
    %372 = vmatpush.msra.mxu0 0.0
    %373 = vmatpush.msra.mxu0 0.0
    %374 = vmatpush.msra.mxu0 %v358
    %375 = vmatpush.msra.mxu0 %v357
    %376 = vmatpush.msra.mxu0 %v356
    %377 = vmatpush.msra.mxu0 %v355
    %378 = vmatmul.f32.gmra.mxu0 %v360
    %v379 = vpop.f32.mrf.mxu0
    %v380 = vadd.f32 0.0, %v379
    %381 = vdwg.mxu0
    %v383 = vsel %vm182, %v303, 0
    %385 = vmatpush.msra.mxu0 0.0
    %386 = vmatpush.msra.mxu0 0.0
    %387 = vmatpush.msra.mxu0 0.0
    %388 = vmatpush.msra.mxu0 0.0
    %389 = vmatpush.msra.mxu0 0.0
    %390 = vmatpush.msra.mxu0 0.0
    %391 = vmatpush.msra.mxu0 0.0
    %392 = vmatpush.msra.mxu0 0.0
    %393 = vmatpush.msra.mxu0 0.0
    %394 = vmatpush.msra.mxu0 0.0
    %395 = vmatpush.msra.mxu0 0.0
    %396 = vmatpush.msra.mxu0 0.0
    %397 = vmatpush.msra.mxu0 %v354
    %398 = vmatpush.msra.mxu0 %v353
    %399 = vmatpush.msra.mxu0 %v352
    %400 = vmatpush.msra.mxu0 %v351
    %401 = vmatmul.f32.gmra.mxu0 %v383
    %v402 = vpop.f32.mrf.mxu0
    %v403 = vadd.f32 %v380, %v402
    %404 = vdwg.mxu0
    %v405 = vld [vmem:[%s12] sm:$0x1]
    %v407 = vperm.slane %v405, 0
    %v409 = vadd.f32 %v403, %v407
    %v410 = vmax.f32 %v409, 0.0
    %v411 = vld [vmem:[%s13] sm:$0xff]
    %v412 = vld [vmem:[%s13 + $0x8] sm:$0xff]
    %v413 = vld [vmem:[%s13 + $0x10] sm:$0xff]
    %v414 = vld [vmem:[%s13 + $0x18] sm:$0xff]
    %v415 = vld [vmem:[%s13 + $0x20] sm:$0xff]
    %v416 = vld [vmem:[%s13 + $0x28] sm:$0xff]
    %v417 = vld [vmem:[%s13 + $0x30] sm:$0xff]
    %v418 = vld [vmem:[%s13 + $0x38] sm:$0xff]
    %v419 = vld [vmem:[%s14] sm:$0x1]
    %v421 = vperm.slane %v419, 0
    %vm423 = vcmask 523264
    %v425 = vsel %vm423, %v410, 0
    %427 = vmatpush.msra.mxu0 0.0
    %428 = vmatpush.msra.mxu0 0.0
    %429 = vmatpush.msra.mxu0 0.0
    %430 = vmatpush.msra.mxu0 0.0
    %431 = vmatpush.msra.mxu0 0.0
    %432 = vmatpush.msra.mxu0 0.0
    %433 = vmatpush.msra.mxu0 0.0
    %434 = vmatpush.msra.mxu0 0.0
    %435 = vmatpush.msra.mxu0 %v418
    %436 = vmatpush.msra.mxu0 %v417
    %437 = vmatpush.msra.mxu0 %v416
    %438 = vmatpush.msra.mxu0 %v415
    %439 = vmatpush.msra.mxu0 %v414
    %440 = vmatpush.msra.mxu0 %v413
    %441 = vmatpush.msra.mxu0 %v412
    %442 = vmatpush.msra.mxu0 %v411
    %443 = vmatmul.f32.gmra.mxu0 %v425
    %v444 = vpop.f32.mrf.mxu0
    %v445 = vadd.f32 %v421, %v444
    %446 = vdwg.mxu0
    %v447 = vmax.f32 %v445, 0.0
    %v448 = vld [vmem:[%s15] sm:$0xff]
    %v449 = vld [vmem:[%s15 + $0x8] sm:$0xff]
    %v450 = vld [vmem:[%s15 + $0x10] sm:$0xff]
    %v451 = vld [vmem:[%s15 + $0x18] sm:$0xff]
    %v452 = vld [vmem:[%s16] sm:$0x1]
    %v454 = vperm.slane %v452, 0
    %v457 = vsel %vm182, %v447, 0
    %459 = vmatpush.msra.mxu0 0.0
    %460 = vmatpush.msra.mxu0 0.0
    %461 = vmatpush.msra.mxu0 0.0
    %462 = vmatpush.msra.mxu0 0.0
    %463 = vmatpush.msra.mxu0 0.0
    %464 = vmatpush.msra.mxu0 0.0
    %465 = vmatpush.msra.mxu0 0.0
    %466 = vmatpush.msra.mxu0 0.0
    %467 = vmatpush.msra.mxu0 0.0
    %468 = vmatpush.msra.mxu0 0.0
    %469 = vmatpush.msra.mxu0 0.0
    %470 = vmatpush.msra.mxu0 0.0
    %471 = vmatpush.msra.mxu0 %v451
    %472 = vmatpush.msra.mxu0 %v450
    %473 = vmatpush.msra.mxu0 %v449
    %474 = vmatpush.msra.mxu0 %v448
    %475 = vmatmul.f32.gmra.mxu0 %v457
    %v476 = vpop.f32.mrf.mxu0
    %v477 = vadd.f32 %v454, %v476
    %478 = vdwg.mxu0
    %vm479 = vcmask 9216
    %480 = vst.msk [vmem:[#allocation7] sm:$0x3] %vm479, %v477
    // Predicated region
    $region78: #{tpu_custom_call.1} parent=1 // pred_check
      _
    $region79: #{tpu_custom_call.1} parent=1 // pred_check_branch
      %482 = sbr.rel (0) target = $region81
    $region80: #{tpu_custom_call.1} parent=1 // pred_region
      %484 = vsyncadd [#allocation4], 0
      %s486 = sshll.u32 [#allocation7], 4
      %s487 = int_to_ptr.vmem [resolvable:$true] %s486
      %s488 = sshll.u32 %s17, 4
      %s489 = int_to_ptr.hbm [resolvable:$true] %s488
      %491 = dma.vmem_to_hbm [thread:$0]  %s487, 32, %s489, [#allocation4]
    $region81: #{tpu_custom_call.1} parent=1 // pred_fallthru
      _
    // Predicated region
    $region82: #{tpu_custom_call.1} parent=1 // pred_check
      _
    $region83: #{tpu_custom_call.1} parent=1 // pred_check_branch
      %493 = sbr.rel (0) target = $region85
    $region84: #{tpu_custom_call.1} parent=1 // pred_region
      %495 = dma.done [#allocation4], 32
    $region85: #{tpu_custom_call.1} parent=1 // pred_fallthru
      _
    %496 = vsyncpa [#allocation3], 1
    %497 = vsyncpa [#allocation6], 1
    %498 = vsyncpa [#allocation4], 1

</llo_original>
